<compile_context>
chip_gen: v6e
topology: v6e:2x2x1
jax: 0.10.0
libtpu: 0.0.40
codegen_flags: <defaults>
</compile_context>

<pallas_src>
import jax
import jax.numpy as jnp
from jax.experimental import pallas as pl
from jax.experimental.pallas import tpu as pltpu

LANE = 128          # lane width (batch minor axis)
MAX_TILE_S = 64     # max sublane-rows of batch per grid step (64*128 = 8192 rows)


def mlp_kernel(p_ref, x_ref, o_ref):
    """Fused 3-layer MLP on one (TILE_S, 128) batch tile, pure VPU.

    p_ref : SMEM (16,) f32, packed [w1(2), b1(1), w2(2), b2(2), w3(6), b3(3)]
    x_ref : VMEM (2, TILE_S, 128) - x_ref[f] is input feature f over the tile
    o_ref : VMEM (3, TILE_S, 128) - o_ref[j] is output feature j over the tile
    """
    x0 = x_ref[0]
    x1 = x_ref[1]

    # self.layer  : Linear(2, 1) + ReLU
    h1 = jnp.maximum(p_ref[0] * x0 + p_ref[1] * x1 + p_ref[2], 0.0)

    # self.layer2 : Linear(1, 2)
    h20 = p_ref[3] * h1 + p_ref[5]
    h21 = p_ref[4] * h1 + p_ref[6]

    # self.layer3 : Linear(2, 3)
    o_ref[0] = p_ref[7] * h20 + p_ref[8] * h21 + p_ref[13]
    o_ref[1] = p_ref[9] * h20 + p_ref[10] * h21 + p_ref[14]
    o_ref[2] = p_ref[11] * h20 + p_ref[12] * h21 + p_ref[15]


def pack_params(params):
    """Hoisted out of the per-call path: pack all weights/biases into (16,) f32."""
    (w1, b1), (w2, b2), (w3, b3) = params
    return jnp.concatenate([
        w1.reshape(-1), b1.reshape(-1),     # idx [0:2], [2]
        w2.reshape(-1), b2.reshape(-1),     # idx [3:5], [5:7]
        w3.reshape(-1), b3.reshape(-1),     # idx [7:13], [13:16]
    ]).astype(jnp.float32)


def _round_up(a, b):
    return ((a + b - 1) // b) * b


@jax.jit
def mynet_forward(x, packed_params):
    """x: (N, 2) float32 -> (N, 3) float32, matching MyNet.forward."""
    n = x.shape[0]
    rows = max(1, -(-n // LANE))                   # batch sublane-rows
    tile_s = min(MAX_TILE_S, _round_up(rows, 8))   # (8,128)-aligned batch tile
    rows_pad = _round_up(rows, tile_s)
    n_pad = rows_pad * LANE
    grid = (rows_pad // tile_s,)

    # Glue (plain JAX, scales only with the activations): feature-major layout,
    # zero-padded up to the tile grid.
    x_t = jnp.zeros((2, n_pad), jnp.float32).at[:, :n].set(x.astype(jnp.float32).T)
    x_t = x_t.reshape(2, rows_pad, LANE)

    out = pl.pallas_call(
        mlp_kernel,
        grid=grid,
        in_specs=[
            pl.BlockSpec(memory_space=pltpu.MemorySpace.SMEM),      # packed params
            pl.BlockSpec((2, tile_s, LANE), lambda i: (0, i, 0)),   # x batch tile
        ],
        out_specs=pl.BlockSpec((3, tile_s, LANE), lambda i: (0, i, 0)),
        out_shape=jax.ShapeDtypeStruct((3, rows_pad, LANE), jnp.float32),
        compiler_params=pltpu.CompilerParams(
            dimension_semantics=("parallel",)),    # batch axis -> both v7x TCs
    )(packed_params, x_t)

    return out.reshape(3, n_pad)[:, :n].T


def init_params(key):
    """Deterministic init mimicking nn.Linear: U(-1/sqrt(fan_in), 1/sqrt(fan_in))."""
    def linear_init(k, out_f, in_f):
        kw, kb = jax.random.split(k)
        bound = 1.0 / jnp.sqrt(jnp.float32(in_f))
        w = jax.random.uniform(kw, (out_f, in_f), jnp.float32, -bound, bound)
        b = jax.random.uniform(kb, (out_f,), jnp.float32, -bound, bound)
        return w, b

    k1, k2, k3 = jax.random.split(key, 3)
    return (
        linear_init(k1, 1, 2),   # self.layer  : Linear(2, 1)
        linear_init(k2, 2, 1),   # self.layer2 : Linear(1, 2)
        linear_init(k3, 3, 2),   # self.layer3 : Linear(2, 3)
    )


def _reference(x, params):
    (w1, b1), (w2, b2), (w3, b3) = params
    h = jnp.maximum(x @ w1.T + b1, 0.0)
    return (h @ w2.T + b2) @ w3.T + b3


if __name__ == "__main__":
    key = jax.random.PRNGKey(0)
    params = init_params(key)
    packed = pack_params(params)   # weight packing done once, not per forward call

    # Same input as the original script: x = [[0.1, 0.8], [0.8, 0.2]]
    x = jnp.array([[0.1, 0.8], [0.8, 0.2]], dtype=jnp.float32)
    out = jax.block_until_ready(mynet_forward(x, packed))
    ref = _reference(x, params)
    assert out.shape == (2, 3)
    assert jnp.allclose(out, ref, atol=1e-5, rtol=1e-5), (out, ref)

    # Larger batch to exercise the multi-tile ("parallel") grid path.
    xb = jax.random.normal(jax.random.PRNGKey(1), (10000, 2), jnp.float32)
    outb = jax.block_until_ready(mynet_forward(xb, packed))
    refb = _reference(xb, params)
    assert outb.shape == (10000, 3)
    assert jnp.allclose(outb, refb, atol=1e-4, rtol=1e-4), "large-batch mismatch"

    print("KERNEL_OK")
</pallas_src>

<mosaic_0001>
module attributes {stable_mosaic.version = 11 : i64} {
  func.func @mlp_kernel(%arg0: i32, %arg1: memref<16xf32, #tpu.memory_space<smem>>, %arg2: memref<2x8x128xf32, #tpu.memory_space<vmem>>, %arg3: memref<3x8x128xf32, #tpu.memory_space<vmem>>) attributes {dimension_semantics = [#tpu.dimension_semantics<parallel>], iteration_bounds = array<i64: 1>, scalar_prefetch = 0 : i64, scratch_operands = 0 : i64, tpu.core_type = #tpu.core_type<tc>, window_params = [{transform_indices = @transform_0, window_bounds = array<i64: 16>}, {transform_indices = @transform_1, window_bounds = array<i64: 2, 8, 128>}, {transform_indices = @transform_2, window_bounds = array<i64: 3, 8, 128>}]} {
    %c0 = arith.constant 0 : index
    %c0_0 = arith.constant 0 : index
    %c0_1 = arith.constant 0 : index
    %0 = vector.load %arg2[%c0, %c0_0, %c0_1] : memref<2x8x128xf32, #tpu.memory_space<vmem>>, vector<1x8x128xf32>
    %1 = vector.shape_cast %0 : vector<1x8x128xf32> to vector<8x128xf32>
    %c1 = arith.constant 1 : index
    %c0_2 = arith.constant 0 : index
    %c0_3 = arith.constant 0 : index
    %2 = vector.load %arg2[%c1, %c0_2, %c0_3] : memref<2x8x128xf32, #tpu.memory_space<vmem>>, vector<1x8x128xf32>
    %3 = vector.shape_cast %2 : vector<1x8x128xf32> to vector<8x128xf32>
    %c0_4 = arith.constant 0 : index
    %4 = memref.load %arg1[%c0_4] : memref<16xf32, #tpu.memory_space<smem>>
    %5 = vector.broadcast %4 : f32 to vector<8x128xf32>
    %6 = arith.mulf %5, %1 : vector<8x128xf32>
    %c1_5 = arith.constant 1 : index
    %7 = memref.load %arg1[%c1_5] : memref<16xf32, #tpu.memory_space<smem>>
    %8 = vector.broadcast %7 : f32 to vector<8x128xf32>
    %9 = arith.mulf %8, %3 : vector<8x128xf32>
    %10 = arith.addf %6, %9 : vector<8x128xf32>
    %c2 = arith.constant 2 : index
    %11 = memref.load %arg1[%c2] : memref<16xf32, #tpu.memory_space<smem>>
    %12 = vector.broadcast %11 : f32 to vector<8x128xf32>
    %13 = arith.addf %10, %12 : vector<8x128xf32>
    %cst = arith.constant 0.000000e+00 : f32
    %14 = vector.broadcast %cst : f32 to vector<8x128xf32>
    %15 = arith.maximumf %13, %14 : vector<8x128xf32>
    %c3 = arith.constant 3 : index
    %16 = memref.load %arg1[%c3] : memref<16xf32, #tpu.memory_space<smem>>
    %17 = vector.broadcast %16 : f32 to vector<8x128xf32>
    %18 = arith.mulf %17, %15 : vector<8x128xf32>
    %c5 = arith.constant 5 : index
    %19 = memref.load %arg1[%c5] : memref<16xf32, #tpu.memory_space<smem>>
    %20 = vector.broadcast %19 : f32 to vector<8x128xf32>
    %21 = arith.addf %18, %20 : vector<8x128xf32>
    %c4 = arith.constant 4 : index
    %22 = memref.load %arg1[%c4] : memref<16xf32, #tpu.memory_space<smem>>
    %23 = vector.broadcast %22 : f32 to vector<8x128xf32>
    %24 = arith.mulf %23, %15 : vector<8x128xf32>
    %c6 = arith.constant 6 : index
    %25 = memref.load %arg1[%c6] : memref<16xf32, #tpu.memory_space<smem>>
    %26 = vector.broadcast %25 : f32 to vector<8x128xf32>
    %27 = arith.addf %24, %26 : vector<8x128xf32>
    %c7 = arith.constant 7 : index
    %28 = memref.load %arg1[%c7] : memref<16xf32, #tpu.memory_space<smem>>
    %29 = vector.broadcast %28 : f32 to vector<8x128xf32>
    %30 = arith.mulf %29, %21 : vector<8x128xf32>
    %c8 = arith.constant 8 : index
    %31 = memref.load %arg1[%c8] : memref<16xf32, #tpu.memory_space<smem>>
    %32 = vector.broadcast %31 : f32 to vector<8x128xf32>
    %33 = arith.mulf %32, %27 : vector<8x128xf32>
    %34 = arith.addf %30, %33 : vector<8x128xf32>
    %c13 = arith.constant 13 : index
    %35 = memref.load %arg1[%c13] : memref<16xf32, #tpu.memory_space<smem>>
    %36 = vector.broadcast %35 : f32 to vector<8x128xf32>
    %37 = arith.addf %34, %36 : vector<8x128xf32>
    %c0_6 = arith.constant 0 : index
    %c0_7 = arith.constant 0 : index
    %c0_8 = arith.constant 0 : index
    %38 = vector.load %arg3[%c0_6, %c0_7, %c0_8] : memref<3x8x128xf32, #tpu.memory_space<vmem>>, vector<1x8x128xf32>
    %39 = vector.shape_cast %38 : vector<1x8x128xf32> to vector<8x128xf32>
    %40 = vector.shape_cast %37 : vector<8x128xf32> to vector<1x8x128xf32>
    tpu.vector_store %arg3[%c0_6, %c0_7, %c0_8], %40 {strides = array<i32>} : memref<3x8x128xf32, #tpu.memory_space<vmem>>, vector<1x8x128xf32>,
    %c9 = arith.constant 9 : index
    %41 = memref.load %arg1[%c9] : memref<16xf32, #tpu.memory_space<smem>>
    %42 = vector.broadcast %41 : f32 to vector<8x128xf32>
    %43 = arith.mulf %42, %21 : vector<8x128xf32>
    %c10 = arith.constant 10 : index
    %44 = memref.load %arg1[%c10] : memref<16xf32, #tpu.memory_space<smem>>
    %45 = vector.broadcast %44 : f32 to vector<8x128xf32>
    %46 = arith.mulf %45, %27 : vector<8x128xf32>
    %47 = arith.addf %43, %46 : vector<8x128xf32>
    %c14 = arith.constant 14 : index
    %48 = memref.load %arg1[%c14] : memref<16xf32, #tpu.memory_space<smem>>
    %49 = vector.broadcast %48 : f32 to vector<8x128xf32>
    %50 = arith.addf %47, %49 : vector<8x128xf32>
    %c1_9 = arith.constant 1 : index
    %c0_10 = arith.constant 0 : index
    %c0_11 = arith.constant 0 : index
    %51 = vector.load %arg3[%c1_9, %c0_10, %c0_11] : memref<3x8x128xf32, #tpu.memory_space<vmem>>, vector<1x8x128xf32>
    %52 = vector.shape_cast %51 : vector<1x8x128xf32> to vector<8x128xf32>
    %53 = vector.shape_cast %50 : vector<8x128xf32> to vector<1x8x128xf32>
    tpu.vector_store %arg3[%c1_9, %c0_10, %c0_11], %53 {strides = array<i32>} : memref<3x8x128xf32, #tpu.memory_space<vmem>>, vector<1x8x128xf32>,
    %c11 = arith.constant 11 : index
    %54 = memref.load %arg1[%c11] : memref<16xf32, #tpu.memory_space<smem>>
    %55 = vector.broadcast %54 : f32 to vector<8x128xf32>
    %56 = arith.mulf %55, %21 : vector<8x128xf32>
    %c12 = arith.constant 12 : index
    %57 = memref.load %arg1[%c12] : memref<16xf32, #tpu.memory_space<smem>>
    %58 = vector.broadcast %57 : f32 to vector<8x128xf32>
    %59 = arith.mulf %58, %27 : vector<8x128xf32>
    %60 = arith.addf %56, %59 : vector<8x128xf32>
    %c15 = arith.constant 15 : index
    %61 = memref.load %arg1[%c15] : memref<16xf32, #tpu.memory_space<smem>>
    %62 = vector.broadcast %61 : f32 to vector<8x128xf32>
    %63 = arith.addf %60, %62 : vector<8x128xf32>
    %c2_12 = arith.constant 2 : index
    %c0_13 = arith.constant 0 : index
    %c0_14 = arith.constant 0 : index
    %64 = vector.load %arg3[%c2_12, %c0_13, %c0_14] : memref<3x8x128xf32, #tpu.memory_space<vmem>>, vector<1x8x128xf32>
    %65 = vector.shape_cast %64 : vector<1x8x128xf32> to vector<8x128xf32>
    %66 = vector.shape_cast %63 : vector<8x128xf32> to vector<1x8x128xf32>
    tpu.vector_store %arg3[%c2_12, %c0_13, %c0_14], %66 {strides = array<i32>} : memref<3x8x128xf32, #tpu.memory_space<vmem>>, vector<1x8x128xf32>,
    return
  }
  func.func @transform_0(%arg0: i32) -> i32 {
    %c0_i32 = arith.constant 0 : i32
    %c0_i32_0 = arith.constant 0 : i32
    return %c0_i32 : i32
  }
  func.func @transform_1(%arg0: i32) -> (i32, i32, i32) {
    %c0_i32 = arith.constant 0 : i32
    %c0_i32_0 = arith.constant 0 : i32
    %c0_i32_1 = arith.constant 0 : i32
    return %c0_i32, %arg0, %c0_i32_0 : i32, i32, i32
  }
  func.func @transform_2(%arg0: i32) -> (i32, i32, i32) {
    %c0_i32 = arith.constant 0 : i32
    %c0_i32_0 = arith.constant 0 : i32
    %c0_i32_1 = arith.constant 0 : i32
    return %c0_i32, %arg0, %c0_i32_0 : i32, i32, i32
  }
}

</mosaic_0001>

<llo_original>
// kernel: mynet_forward.1
$region0: #{mynet_forward.1}
  #allocation0 [shape = 'u32[]', space=smem, size = 0x4, offset = 0x4, fixed_abs, tag = 'smem constant byte address 0x4 - core index']
  #allocation1 [shape = 'u32[144,128]{1,0:T(1,128)}', space=vmem, size = 0x12000, scoped, tag = 'internal scratch']
  %s0 = inlined_call_operand.vmem [shape: f32[16], index: 0, kind: input, shape index: {}]
  %s1 = inlined_call_operand.vmem [shape: f32[2,8,128], index: 1, kind: input, shape index: {}]
  %s2 = inlined_call_operand.vmem [shape: f32[3,8,128], index: 2, kind: output, shape index: {}]
  %s3 = sld [smem:[#allocation0]]
  $region22: #{mynet_forward.1} parent=0
    _
  %s5 = ssub.s32 1, %s3
  %s6 = scalar_select 0, %s5, %s3
  $region1: #{mynet_forward.1} parent=0
    #allocation2 [shape = 'u8[512]{0}', space=smem, size = 0x200, scoped, tag = 'input window, operand 0, single buffered']
    #allocation3 [shape = 's32[1]{0}', space=sflag, size = 0x4, scoped, tag = 'scoped memory for mynet_forward.1']
    %7 = vsyncpa [#allocation3], 0
    // Predicated region
    $region2: #{mynet_forward.1} parent=1 // pred_check
      _
    $region3: #{mynet_forward.1} parent=1 // pred_check_branch
      %9 = sbr.rel (0) target = $region5
    $region4: #{mynet_forward.1} parent=1 // pred_region
      %s11 = ssub.s32 16, 16
      %12 = vsyncadd [#allocation3], %s11
      %s14 = sshll.u32 %s0, 4
      %s15 = int_to_ptr.vmem [resolvable:$true] %s14
      %17 = dma.vmem_to_smem %s15, 16, [#allocation2], [#allocation3]
    $region5: #{mynet_forward.1} parent=1 // pred_fallthru
      _
    // Predicated region
    $region6: #{mynet_forward.1} parent=1 // pred_check
      _
    $region7: #{mynet_forward.1} parent=1 // pred_check_branch
      %19 = sbr.rel (0) target = $region9
    $region8: #{mynet_forward.1} parent=1 // pred_region
      _
    $region9: #{mynet_forward.1} parent=1 // pred_fallthru
      _
    // Predicated region
    $region10: #{mynet_forward.1} parent=1 // pred_check
      _
    $region11: #{mynet_forward.1} parent=1 // pred_check_branch
      %21 = sbr.rel (0) target = $region13
    $region12: #{mynet_forward.1} parent=1 // pred_region
      %22 = dma.done [#allocation3], 16
    $region13: #{mynet_forward.1} parent=1 // pred_fallthru
      _
    %23 = sfence
    %v24 = vld [vmem:[%s1] sm:$0xff]
    %s25 = scalar_lea.vmem %s1, 8
    %v26 = vld [vmem:[%s25] sm:$0xff]
    %s27 = sld [smem:[#allocation2]]
    %v28 = vstv %s27
    %v29 = vmul.f32 %v28, %v24
    %s30 = sld [smem:[#allocation2 + $0x1]]
    %v31 = vstv %s30
    %v32 = vmul.f32 %v31, %v26
    %v33 = vadd.f32 %v29, %v32
    %s34 = sld [smem:[#allocation2 + $0x2]]
    %v35 = vstv %s34
    %v36 = vadd.f32 %v33, %v35
    %v37 = vmax.f32 %v36, 0.0
    %s38 = sld [smem:[#allocation2 + $0x3]]
    %v39 = vstv %s38
    %v40 = vmul.f32 %v39, %v37
    %s41 = sld [smem:[#allocation2 + $0x5]]
    %v42 = vstv %s41
    %v43 = vadd.f32 %v40, %v42
    %s44 = sld [smem:[#allocation2 + $0x4]]
    %v45 = vstv %s44
    %v46 = vmul.f32 %v45, %v37
    %s47 = sld [smem:[#allocation2 + $0x6]]
    %v48 = vstv %s47
    %v49 = vadd.f32 %v46, %v48
    %s50 = sld [smem:[#allocation2 + $0x7]]
    %v51 = vstv %s50
    %v52 = vmul.f32 %v51, %v43
    %s53 = sld [smem:[#allocation2 + $0x8]]
    %v54 = vstv %s53
    %v55 = vmul.f32 %v54, %v49
    %v56 = vadd.f32 %v52, %v55
    %s57 = sld [smem:[#allocation2 + $0xd]]
    %v58 = vstv %s57
    %v59 = vadd.f32 %v56, %v58
    %60 = vst [vmem:[%s2] sm:$0xff] %v59
    %s61 = sld [smem:[#allocation2 + $0x9]]
    %v62 = vstv %s61
    %v63 = vmul.f32 %v62, %v43
    %s64 = sld [smem:[#allocation2 + $0xa]]
    %v65 = vstv %s64
    %v66 = vmul.f32 %v65, %v49
    %v67 = vadd.f32 %v63, %v66
    %s68 = sld [smem:[#allocation2 + $0xe]]
    %v69 = vstv %s68
    %v70 = vadd.f32 %v67, %v69
    %s71 = scalar_lea.vmem %s2, 8
    %72 = vst [vmem:[%s71] sm:$0xff] %v70
    %s73 = sld [smem:[#allocation2 + $0xb]]
    %v74 = vstv %s73
    %v75 = vmul.f32 %v74, %v43
    %s76 = sld [smem:[#allocation2 + $0xc]]
    %v77 = vstv %s76
    %v78 = vmul.f32 %v77, %v49
    %v79 = vadd.f32 %v75, %v78
    %s80 = sld [smem:[#allocation2 + $0xf]]
    %v81 = vstv %s80
    %v82 = vadd.f32 %v79, %v81
    %s83 = scalar_lea.vmem %s2, 16
    %84 = vst [vmem:[%s83] sm:$0xff] %v82
    // Predicated region
    $region14: #{mynet_forward.1} parent=1 // pred_check
      _
    $region15: #{mynet_forward.1} parent=1 // pred_check_branch
      %86 = sbr.rel (0) target = $region17
    $region16: #{mynet_forward.1} parent=1 // pred_region
      _
    $region17: #{mynet_forward.1} parent=1 // pred_fallthru
      _
    // Predicated region
    $region18: #{mynet_forward.1} parent=1 // pred_check
      _
    $region19: #{mynet_forward.1} parent=1 // pred_check_branch
      %88 = sbr.rel (0) target = $region21
    $region20: #{mynet_forward.1} parent=1 // pred_region
      _
    $region21: #{mynet_forward.1} parent=1 // pred_fallthru
      _
    %89 = vsyncpa [#allocation3], 1

</llo_original>
